<compile_context>
chip_gen: v7x
topology: tpu7x:2x2x1
jax: 0.10.0
libtpu: 0.0.40
codegen_flags: <defaults>
</compile_context>

<pallas_src>
import jax
import jax.numpy as jnp
from jax.experimental import pallas as pl
from jax.experimental.pallas import tpu as pltpu


# ---------------------------------------------------------------------------
# Kernel: h = relu(x); acc = h @ W + b with W = concat([Wa, Wc]).T (exact
# width A+1); policy / value written as two exact-width outputs.
# ---------------------------------------------------------------------------
def _aclinear_kernel(x_ref, w_ref, b_ref, pol_ref, val_ref):
    a = pol_ref.shape[-1]
    h = jnp.maximum(x_ref[...], 0)
    # In-kernel cast to the (resident) weight dtype: zero extra HBM bytes,
    # native bf16 MXU when weights_bf16=True.  Accumulation stays f32.
    h = h.astype(w_ref.dtype)
    acc = jnp.dot(h, w_ref[...], preferred_element_type=jnp.float32)
    acc = acc + b_ref[...].astype(jnp.float32)
    pol_ref[...] = acc[:, :a].astype(pol_ref.dtype)
    val_ref[...] = acc[:, a:a + 1].astype(val_ref.dtype)


def _round_down(x, m):
    return (x // m) * m


def _vmem_budget_bytes():
    """Per-core VMEM budget: physical capacity minus headroom for compiler
    internals.  ~51 MiB on v7x (64 MiB physical), ~102 MiB on v5e/v6e."""
    cap = 64 << 20  # conservative fallback = smallest (v7x) physical VMEM
    try:
        info = pltpu.get_tpu_info()
        cap = int(getattr(info, "vmem_capacity_bytes", cap))
    except Exception:
        pass
    return max(16 << 20, min(int(cap * 0.8), cap - (8 << 20)))


def _pinned_block_spec(shape):
    """Constant-index (resident) BlockSpec, single-buffered when supported."""
    index_map = lambda i: (0,) * len(shape)
    try:
        return pl.BlockSpec(shape, index_map, pipeline_mode=pl.Buffered(1))
    except TypeError:  # older jax without pipeline_mode kwarg
        return pl.BlockSpec(shape, index_map)


def aclinear_forward(x, wa, ba, wc, bc, *, block_b=None, gridless_max_b=256,
                     weights_bf16=False):
    """Fused AClinear forward on TPU via Pallas.

    x  : [B, F]  activations
    wa : [A, F]  actor weight     ba : [1, A] actor bias
    wc : [1, F]  critic weight    bc : [1, 1] critic bias
    returns dict(policy=[B, A], value=[B, 1])
    """
    B, F = x.shape
    A = wa.shape[0]
    N = A + 1
    out_dtype = x.dtype

    # Wrapper-side layout plumbing (XLA-fused): fused, pre-transposed weight
    # [F, A+1] and bias [1, A+1] at EXACT width (no lane padding).
    w = jnp.concatenate([wa, wc], axis=0).T                      # [F, N]
    b = jnp.concatenate([ba, bc], axis=1).astype(jnp.float32)    # [1, N]
    if weights_bf16:
        # Only the resident weight is cast (amortized).  x is NOT cast in the
        # wrapper (that would add an un-fused HBM pass); h is cast in-kernel.
        w = w.astype(jnp.bfloat16)

    x_item = jnp.dtype(x.dtype).itemsize
    w_item = jnp.dtype(w.dtype).itemsize
    o_item = jnp.dtype(out_dtype).itemsize

    budget = _vmem_budget_bytes()
    resident = w_item * F * N + 4 * N            # single-buffered W + bias
    headroom = 2 << 20

    out_shapes = (jax.ShapeDtypeStruct((B, A), out_dtype),
                  jax.ShapeDtypeStruct((B, 1), out_dtype))

    gridless_need = x_item * B * F + resident + o_item * B * N + headroom
    if B <= gridless_max_b and gridless_need <= budget:
        # Small batch: whole problem VMEM-resident, no grid / pipeline overhead.
        policy, value = pl.pallas_call(
            _aclinear_kernel,
            out_shape=out_shapes,
            in_specs=[pl.BlockSpec(memory_space=pltpu.MemorySpace.VMEM)] * 3,
            out_specs=(pl.BlockSpec(memory_space=pltpu.MemorySpace.VMEM),
                       pl.BlockSpec(memory_space=pltpu.MemorySpace.VMEM)),
            compiler_params=pltpu.CompilerParams(
                vmem_limit_bytes=int(min(max(2 * gridless_need, 16 << 20),
                                         budget))),
        )(x, w, b)
    else:
        # Batch-tiled path.  tB derived from the VMEM budget: double-buffered
        # x / policy / value tiles + single-buffered resident W / bias.
        per_row = 2 * (x_item * F + o_item * N)
        tb_max = (budget - resident - headroom) // max(per_row, 1)
        if block_b is not None:
            desired = block_b
        else:
            desired = 2048 if budget >= (80 << 20) else 1024   # bigger on v5e/v6e
        tB = max(8, _round_down(min(desired, tb_max, max(B, 8)), 8))
        grid_b = pl.cdiv(B, tB)   # ragged last block: no wrapper pad / slice

        need = per_row * tB + resident + headroom
        vmem_limit = int(min(max(need, 16 << 20), budget))

        policy, value = pl.pallas_call(
            _aclinear_kernel,
            out_shape=out_shapes,
            grid_spec=pl.GridSpec(
                grid=(grid_b,),
                in_specs=[
                    pl.BlockSpec((tB, F), lambda i: (i, 0)),   # x tile
                    _pinned_block_spec((F, N)),                # W (resident, 1-buf)
                    _pinned_block_spec((1, N)),                # bias (resident, 1-buf)
                ],
                out_specs=(
                    pl.BlockSpec((tB, A), lambda i: (i, 0)),   # policy (exact width)
                    pl.BlockSpec((tB, 1), lambda i: (i, 0)),   # value  (exact width)
                ),
            ),
            compiler_params=pltpu.CompilerParams(
                # Shards the batch axis across TensorCores on multi-TC parts.
                dimension_semantics=("parallel",),
                vmem_limit_bytes=vmem_limit,
            ),
        )(x, w, b)

    return dict(policy=policy, value=value)


def init_params(key, action_sz, infer_sz):
    """Deterministic init mimicking nn.Linear default U(-1/sqrt(in), 1/sqrt(in))."""
    k1, k2, k3, k4 = jax.random.split(key, 4)
    bound = 1.0 / jnp.sqrt(jnp.float32(infer_sz))
    wa = jax.random.uniform(k1, (action_sz, infer_sz), jnp.float32, -bound, bound)
    ba = jax.random.uniform(k2, (1, action_sz), jnp.float32, -bound, bound)
    wc = jax.random.uniform(k3, (1, infer_sz), jnp.float32, -bound, bound)
    bc = jax.random.uniform(k4, (1, 1), jnp.float32, -bound, bound)
    return wa, ba, wc, bc


def _reference(x, wa, ba, wc, bc):
    h = jnp.maximum(x, 0.0)
    return h @ wa.T + ba[0], h @ wc.T + bc[0]


if __name__ == "__main__":
    key = jax.random.PRNGKey(0)
    k_x, k_p, k_x2, k_p2 = jax.random.split(key, 4)

    # --- small case (gridless path), shapes matching the original module ----
    batch, infer_sz, action_sz = 8, 32, 4
    x = jax.random.normal(k_x, (batch, infer_sz), jnp.float32)
    wa, ba, wc, bc = init_params(k_p, action_sz, infer_sz)

    out = aclinear_forward(x, wa, ba, wc, bc)
    jax.block_until_ready(out)
    ref_p, ref_v = _reference(x, wa, ba, wc, bc)
    assert out["policy"].shape == (batch, action_sz)
    assert out["value"].shape == (batch, 1)
    assert jnp.allclose(out["policy"], ref_p, atol=1e-5, rtol=1e-5)
    assert jnp.allclose(out["value"], ref_v, atol=1e-5, rtol=1e-5)

    # --- larger case: batch-tiled "parallel" grid with a ragged last block ---
    batch2, infer2, action2 = 272, 128, 5          # 272 = 2*128 + 16 -> masked tail
    x2 = jax.random.normal(k_x2, (batch2, infer2), jnp.float32)
    wa2, ba2, wc2, bc2 = init_params(k_p2, action2, infer2)

    out2 = aclinear_forward(x2, wa2, ba2, wc2, bc2, block_b=128)
    jax.block_until_ready(out2)
    ref_p2, ref_v2 = _reference(x2, wa2, ba2, wc2, bc2)
    assert out2["policy"].shape == (batch2, action2)
    assert out2["value"].shape == (batch2, 1)
    assert jnp.allclose(out2["policy"], ref_p2, atol=1e-4, rtol=1e-4)
    assert jnp.allclose(out2["value"], ref_v2, atol=1e-4, rtol=1e-4)

    # --- bf16-resident-weights path (in-kernel activation cast, f32 accum) ---
    out3 = aclinear_forward(x, wa, ba, wc, bc, weights_bf16=True)
    jax.block_until_ready(out3)
    assert jnp.allclose(out3["policy"], ref_p, atol=5e-2, rtol=5e-2)
    assert jnp.allclose(out3["value"], ref_v, atol=5e-2, rtol=5e-2)

    print("KERNEL_OK")
</pallas_src>

<mosaic_0001>
module attributes {stable_mosaic.version = 11 : i64} {
  func.func @_aclinear_kernel(%arg0: memref<8x32xf32, #tpu.memory_space<vmem>>, %arg1: memref<32x5xf32, #tpu.memory_space<vmem>>, %arg2: memref<1x5xf32, #tpu.memory_space<vmem>>, %arg3: memref<8x4xf32, #tpu.memory_space<vmem>>, %arg4: memref<8x1xf32, #tpu.memory_space<vmem>>) attributes {dimension_semantics = [], scalar_prefetch = 0 : i64, scratch_operands = 0 : i64, tpu.core_type = #tpu.core_type<tc>} {
    %c0 = arith.constant 0 : index
    %c0_0 = arith.constant 0 : index
    %0 = vector.load %arg0[%c0, %c0_0] : memref<8x32xf32, #tpu.memory_space<vmem>>, vector<8x32xf32>
    %cst = arith.constant 0.000000e+00 : f32
    %1 = vector.broadcast %cst : f32 to vector<8x32xf32>
    %2 = arith.maximumf %0, %1 : vector<8x32xf32>
    %c0_1 = arith.constant 0 : index
    %c0_2 = arith.constant 0 : index
    %3 = vector.load %arg1[%c0_1, %c0_2] : memref<32x5xf32, #tpu.memory_space<vmem>>, vector<32x5xf32>
    %cst_3 = arith.constant dense<0.000000e+00> : vector<8x5xf32>
    %4 = tpu.matmul %2, %3, %cst_3 {dimension_numbers = #tpu.dot_dimension_numbers<[1], [0], [0], [1], [0, 0, 1, 1], [], []>} : vector<8x32xf32>, vector<32x5xf32>, vector<8x5xf32> -> vector<8x5xf32>
    %c0_4 = arith.constant 0 : index
    %c0_5 = arith.constant 0 : index
    %5 = vector.load %arg2[%c0_4, %c0_5] : memref<1x5xf32, #tpu.memory_space<vmem>>, vector<1x5xf32>
    %6 = vector.broadcast %5 : vector<1x5xf32> to vector<8x5xf32>
    %7 = arith.addf %4, %6 : vector<8x5xf32>
    %8 = vector.extract_strided_slice %7 {offsets = [0, 0], sizes = [8, 4], strides = [1, 1]} : vector<8x5xf32> to vector<8x4xf32>
    %c0_6 = arith.constant 0 : index
    %c0_7 = arith.constant 0 : index
    %9 = vector.load %arg3[%c0_6, %c0_7] : memref<8x4xf32, #tpu.memory_space<vmem>>, vector<8x4xf32>
    tpu.vector_store %arg3[%c0_6, %c0_7], %8 {strides = array<i32>} : memref<8x4xf32, #tpu.memory_space<vmem>>, vector<8x4xf32>,
    %10 = vector.extract_strided_slice %7 {offsets = [0, 4], sizes = [8, 1], strides = [1, 1]} : vector<8x5xf32> to vector<8x1xf32>
    %c0_8 = arith.constant 0 : index
    %c0_9 = arith.constant 0 : index
    %11 = vector.load %arg4[%c0_8, %c0_9] : memref<8x1xf32, #tpu.memory_space<vmem>>, vector<8x1xf32>
    tpu.vector_store %arg4[%c0_8, %c0_9], %10 {strides = array<i32>} : memref<8x1xf32, #tpu.memory_space<vmem>>, vector<8x1xf32>,
    return
  }
}

</mosaic_0001>

<llo_original>
// kernel: tpu_custom_call.1
$region0: #{tpu_custom_call.1}
  #allocation0 [shape = 'u32[]', space=smem, size = 0x4, offset = 0x4, fixed_abs, tag = 'smem constant byte address 0x4 - core index']
  #allocation1 [shape = 'u32[144,128]{1,0:T(1,128)}', space=vmem, size = 0x12000, scoped, tag = 'internal scratch']
  %s0 = inlined_call_operand.vmem [shape: f32[8,32], index: 0, kind: input, shape index: {}]
  %s1 = inlined_call_operand.vmem [shape: f32[32,5], index: 1, kind: input, shape index: {}]
  %s2 = inlined_call_operand.vmem [shape: f32[1,5], index: 2, kind: input, shape index: {}]
  %s3 = inlined_call_operand.vmem [shape: f32[8,4], index: 3, kind: output, shape index: {0}]
  %s4 = inlined_call_operand.vmem [shape: f32[8,1], index: 4, kind: output, shape index: {1}]
  %5 = xla_tuple %s3, %s4
  %s6 = sld [smem:[#allocation0]]
  $region30: #{tpu_custom_call.1} parent=0
    _
  %s8 = ssub.s32 1, %s6
  %s9 = scalar_select 0, %s8, %s6
  // Predicated region
  $region2: #{tpu_custom_call.1} parent=0 // pred_check
    _
  $region3: #{tpu_custom_call.1} parent=0 // pred_check_branch
    %11 = sbr.rel (0) target = $region5
  $region4: #{tpu_custom_call.1} parent=0 // pred_region
    _
  $region5: #{tpu_custom_call.1} parent=0 // pred_fallthru
    _
  // Predicated region
  $region6: #{tpu_custom_call.1} parent=0 // pred_check
    _
  $region7: #{tpu_custom_call.1} parent=0 // pred_check_branch
    %13 = sbr.rel (0) target = $region9
  $region8: #{tpu_custom_call.1} parent=0 // pred_region
    _
  $region9: #{tpu_custom_call.1} parent=0 // pred_fallthru
    _
  // Predicated region
  $region10: #{tpu_custom_call.1} parent=0 // pred_check
    _
  $region11: #{tpu_custom_call.1} parent=0 // pred_check_branch
    %15 = sbr.rel (0) target = $region13
  $region12: #{tpu_custom_call.1} parent=0 // pred_region
    _
  $region13: #{tpu_custom_call.1} parent=0 // pred_fallthru
    _
  %v16 = vld [vmem:[%s0] sm:$0xff]
  %v17 = vmax.f32 %v16, 0.0
  %v18 = vld [vmem:[%s1] sm:$0xff]
  %v19 = vld [vmem:[%s1 + $0x8] sm:$0xff]
  %v20 = vld [vmem:[%s1 + $0x10] sm:$0xff]
  %v21 = vld [vmem:[%s1 + $0x18] sm:$0xff]
  %v22 = vld [vmem:[%s2] sm:$0x1]
  %v24 = vlaneseq
  %v25 = vshrl.u32 %v24, 7
  %v26 = vsub.s32 0, %v25
  %v27 = vrot.slane %v22, %v26
  %vm29 = vcmask 261120
  %v31 = vsel %vm29, %v17, 0
  %33 = vmatprep.subr.mxu0 0.0
  %34 = vmatpush1.msra.mxu0 %v18
  %35 = vmatprep.subr.mxu0 0.0
  %36 = vmatpush1.msra.mxu0 %v19
  %37 = vmatprep.subr.mxu0 0.0
  %38 = vmatpush1.msra.mxu0 %v20
  %39 = vmatprep.subr.mxu0 0.0
  %40 = vmatpush1.msra.mxu0 %v21
  %41 = vmatprep.subr.mxu0 0.0
  %42 = vmatpush1.msra.mxu0 0.0
  %43 = vmatprep.subr.mxu0 0.0
  %44 = vmatpush1.msra.mxu0 0.0
  %45 = vmatprep.subr.mxu0 0.0
  %46 = vmatpush1.msra.mxu0 0.0
  %47 = vmatprep.subr.mxu0 0.0
  %48 = vmatpush1.msra.mxu0 0.0
  %49 = vmatprep.subr.mxu0 0.0
  %50 = vmatpush1.msra.mxu0 0.0
  %51 = vmatprep.subr.mxu0 0.0
  %52 = vmatpush1.msra.mxu0 0.0
  %53 = vmatprep.subr.mxu0 0.0
  %54 = vmatpush1.msra.mxu0 0.0
  %55 = vmatprep.subr.mxu0 0.0
  %56 = vmatpush1.msra.mxu0 0.0
  %57 = vmatprep.subr.mxu0 0.0
  %58 = vmatpush1.msra.mxu0 0.0
  %59 = vmatprep.subr.mxu0 0.0
  %60 = vmatpush1.msra.mxu0 0.0
  %61 = vmatprep.subr.mxu0 0.0
  %62 = vmatpush1.msra.mxu0 0.0
  %63 = vmatprep.subr.mxu0 0.0
  %64 = vmatpush1.msra.mxu0 0.0
  %65 = vmatprep.subr.mxu0 0.0
  %66 = vmatpush1.msra.mxu0 0.0
  %67 = vmatprep.subr.mxu0 0.0
  %68 = vmatpush1.msra.mxu0 0.0
  %69 = vmatprep.subr.mxu0 0.0
  %70 = vmatpush1.msra.mxu0 0.0
  %71 = vmatprep.subr.mxu0 0.0
  %72 = vmatpush1.msra.mxu0 0.0
  %73 = vmatprep.subr.mxu0 0.0
  %74 = vmatpush1.msra.mxu0 0.0
  %75 = vmatprep.subr.mxu0 0.0
  %76 = vmatpush1.msra.mxu0 0.0
  %77 = vmatprep.subr.mxu0 0.0
  %78 = vmatpush1.msra.mxu0 0.0
  %79 = vmatprep.subr.mxu0 0.0
  %80 = vmatpush1.msra.mxu0 0.0
  %81 = vmatprep.subr.mxu0 0.0
  %82 = vmatpush1.msra.mxu0 0.0
  %83 = vmatprep.subr.mxu0 0.0
  %84 = vmatpush1.msra.mxu0 0.0
  %85 = vmatprep.subr.mxu0 0.0
  %86 = vmatpush1.msra.mxu0 0.0
  %87 = vmatprep.subr.mxu0 0.0
  %88 = vmatpush1.msra.mxu0 0.0
  %89 = vmatprep.subr.mxu0 0.0
  %90 = vmatpush1.msra.mxu0 0.0
  %91 = vmatprep.subr.mxu0 0.0
  %92 = vmatpush1.msra.mxu0 0.0
  %93 = vmatprep.subr.mxu0 0.0
  %94 = vmatpush1.msra.mxu0 0.0
  %95 = vmatprep.subr.mxu0 0.0
  %96 = vmatpush1.msra.mxu0 0.0
  %97 = vmatprep.mubr.f32.mxu0 0.0
  %98 = vmatmul.mubr.f32.gmra.mrb[0].mxu0 %v31
  %v99 = vpop.f32.mrb[0].mxu0
  %v100 = vadd.f32 %v27, %v99
  %v101 = vpop.f32.mrb[0].mxu0
  %102 = vdwg.mxu0
  %vm103 = vcmask 31744
  %104 = vst.msk [vmem:[%s3] sm:$0xff] %vm103, %v100
  %106 = vrot.lane.b32.xlu0 %v100, 124
  %v107 = vpop.permute.xlu0 %106
  %vm109 = vcmask 7168
  %110 = vst.msk [vmem:[%s4] sm:$0xff] %vm109, %v107
  // Predicated region
  $region14: #{tpu_custom_call.1} parent=0 // pred_check
    _
  $region15: #{tpu_custom_call.1} parent=0 // pred_check_branch
    %112 = sbr.rel (0) target = $region17
  $region16: #{tpu_custom_call.1} parent=0 // pred_region
    _
  $region17: #{tpu_custom_call.1} parent=0 // pred_fallthru
    _
  // Predicated region
  $region18: #{tpu_custom_call.1} parent=0 // pred_check
    _
  $region19: #{tpu_custom_call.1} parent=0 // pred_check_branch
    %114 = sbr.rel (0) target = $region21
  $region20: #{tpu_custom_call.1} parent=0 // pred_region
    _
  $region21: #{tpu_custom_call.1} parent=0 // pred_fallthru
    _
  // Predicated region
  $region22: #{tpu_custom_call.1} parent=0 // pred_check
    _
  $region23: #{tpu_custom_call.1} parent=0 // pred_check_branch
    %116 = sbr.rel (0) target = $region25
  $region24: #{tpu_custom_call.1} parent=0 // pred_region
    _
  $region25: #{tpu_custom_call.1} parent=0 // pred_fallthru
    _
  // Predicated region
  $region26: #{tpu_custom_call.1} parent=0 // pred_check
    _
  $region27: #{tpu_custom_call.1} parent=0 // pred_check_branch
    %118 = sbr.rel (0) target = $region29
  $region28: #{tpu_custom_call.1} parent=0 // pred_region
    _
  $region29: #{tpu_custom_call.1} parent=0 // pred_fallthru
    _

</llo_original>
